<compile_context>
chip_gen: v5e
topology: v5e:2x2
jax: 0.10.0
libtpu: 0.0.40
codegen_flags: <defaults>
</compile_context>

<pallas_src>
import functools

import jax
import jax.numpy as jnp
import numpy as np
from jax.experimental import pallas as pl
from jax.experimental.pallas import tpu as pltpu


# ---------------------------------------------------------------------------
# Kernel
# ---------------------------------------------------------------------------
def _tomask_kernel(colors_ref, classes_ref, x_ref, o_ref, *, num_colors, fill):
    """One (tile_h, W) tile of the class-id mask.

    colors_ref : SMEM (K,) int32 -- packed RGB (r | g<<8 | b<<16) per entry
    classes_ref: SMEM (K,) int32 -- class id per entry
    x_ref      : VMEM (tile_h, W) int32 -- packed-RGB pixels (-1 = never match)
    o_ref      : VMEM (tile_h, W) int8/int16/int32 -- class-id mask
    """
    px = x_ref[...]
    mask = jnp.full(px.shape, fill, dtype=jnp.int32)

    # Sequential selects preserve image2Map's "later colors overwrite earlier
    # matches" semantics.  num_colors is a trace-time Python int; fully unroll
    # up to 64 colors (v7x becomes VALU-bound around ~6 colors, so loop
    # bookkeeping costs real cycles), fall back to a partially unrolled
    # fori_loop for very large tables to bound code size.
    if num_colors <= 64:
        for k in range(num_colors):
            mask = jnp.where(px == colors_ref[k], classes_ref[k], mask)
    else:
        def body(k, m):
            return jnp.where(px == colors_ref[k], classes_ref[k], m)
        mask = jax.lax.fori_loop(0, num_colors, body, mask, unroll=8)

    o_ref[...] = mask.astype(o_ref.dtype)


# ---------------------------------------------------------------------------
# Tile-size / dtype heuristics
# ---------------------------------------------------------------------------
def _round_down(v, m):
    return (v // m) * m


def _round_up(v, m):
    return -(-v // m) * m


def _bytes_per_row(w, out_itemsize):
    # Double-buffered (input int32 + output) blocks plus an allowance for
    # in-kernel whole-tile temporaries (packed pixels, int32 mask, one temp).
    return (2 * (4 + out_itemsize) + 3 * 4) * w


def _max_tile_rows(w, out_itemsize, align, budget_bytes):
    return max(align,
               _round_down(budget_bytes // max(_bytes_per_row(w, out_itemsize), 1),
                           align))


def _choose_tile_h(h, w, out_itemsize, align, budget_bytes):
    t = _max_tile_rows(w, out_itemsize, align, budget_bytes)
    # Aim for >=4 row-tiles only when tiles can stay >=256 rows: v7x shards the
    # parallel grid axis across 2 TensorCores, while 1-TC v5e/v6e just want the
    # biggest tile that fits the VMEM budget (per-step overhead ~0.35us).
    if h >= 4 * 256:
        t = min(t, max(256, _round_up(-(-h // 4), align)))
    if t >= h:
        return h                      # single block == full H (no alignment need)
    # Best effort: even number of row-tiles (v7x 2-TC balance).
    steps = -(-h // t)
    if steps % 2 == 1:
        t_even = _round_up(-(-h // (steps + 1)), align)
        if align <= t_even < t:
            t = t_even
    return t


def _validate_tile_h(tile_h, h, w, out_itemsize, align, budget_bytes):
    if tile_h >= h:
        return h
    tile_h = max(align, _round_down(tile_h, align))
    tile_h = min(tile_h, _max_tile_rows(w, out_itemsize, align, budget_bytes))
    return h if tile_h >= h else tile_h


def _select_out_dtype(ids_np, fill, out_dtype):
    lo = min(int(ids_np.min()), fill)
    hi = max(int(ids_np.max()), fill)
    if out_dtype is not None:
        odt = np.dtype(out_dtype)
        if odt not in (np.dtype(np.int8), np.dtype(np.int16), np.dtype(np.int32)):
            raise ValueError("out_dtype must be int8, int16 or int32 "
                             "(use as_int64=True for torch.long parity)")
        info = np.iinfo(odt)
        if lo < info.min or hi > info.max:
            raise ValueError(f"class ids / fill do not fit {odt}")
        return odt
    for dt in (np.int8, np.int16, np.int32):
        info = np.iinfo(dt)
        if info.min <= lo and hi <= info.max:
            return np.dtype(dt)
    raise ValueError("class ids / fill do not fit int32")


# ---------------------------------------------------------------------------
# pallas_call wrapper
# ---------------------------------------------------------------------------
@functools.partial(jax.jit, static_argnames=("fill", "tile_h", "out_dtype"))
def _to_mask_core(x_hwc, packed_colors, class_ids, *, fill, tile_h, out_dtype):
    H, W, _ = x_hwc.shape
    odt = np.dtype(out_dtype)

    # Single fused elementwise pass: pack RGB into one int32 per pixel.
    xi = x_hwc.astype(jnp.int32)
    r, g, b = xi[..., 0], xi[..., 1], xi[..., 2]
    packed = r | (g << 8) | (b << 16)
    if np.dtype(x_hwc.dtype) != np.dtype(np.uint8):
        # Non-uint8 inputs: values outside [0, 255] can never match a table
        # color in the reference -> map them to -1, which no packed color
        # (all >= 0) can equal, instead of silently wrapping.
        in_range = ((r | g | b) >= 0) & (r <= 255) & (g <= 255) & (b <= 255)
        packed = jnp.where(in_range, packed, jnp.int32(-1))

    num_colors = int(packed_colors.shape[0])
    out_itemsize = odt.itemsize
    vmem_limit = int(min(56 << 20,
                         max(_bytes_per_row(W, out_itemsize) * tile_h + (4 << 20),
                             16 << 20)))

    kernel = functools.partial(_tomask_kernel, num_colors=num_colors,
                               fill=int(fill))

    return pl.pallas_call(
        kernel,
        out_shape=jax.ShapeDtypeStruct((1, H, W), odt),
        grid_spec=pltpu.PrefetchScalarGridSpec(
            num_scalar_prefetch=2,            # packed colors, class ids -> SMEM
            grid=(pl.cdiv(H, tile_h),),       # ragged last row-block is fine
            in_specs=[
                pl.BlockSpec((tile_h, W), lambda i, colors, cls: (i, 0)),
            ],
            out_specs=pl.BlockSpec((None, tile_h, W),
                                   lambda i, colors, cls: (0, i, 0)),
        ),
        compiler_params=pltpu.CompilerParams(
            dimension_semantics=("parallel",),
            vmem_limit_bytes=vmem_limit,
        ),
    )(packed_colors, class_ids, packed)


def to_mask(x_hwc, colors, class_ids, *, fill=0, out_dtype=None, tile_h=None,
            as_int64=False, vmem_budget_bytes=24 << 20):
    """JAX/Pallas equivalent of ToMask.forward (size=None path).

    x_hwc     : (H, W, 3) uint8 (or integer) RGB image
    colors    : (K, 3) color table (keys of ToMask's `map_`), values in [0,255]
    class_ids : (K,)   class ids   (values of `map_`)
    returns   : (1, H, W) mask; dtype auto-narrows to int8/int16 when the class
                ids and `fill` fit (int32 otherwise).  Pass out_dtype=jnp.int32
                to force, or as_int64=True for torch.long parity (only truly
                64-bit under jax_enable_x64 — cast in the consumer otherwise).
    """
    # TODO(synk): the `size` (cv.resize) path of ToMask is not implemented
    # here; resize with jax.image.resize before calling this.
    H, W, C = x_hwc.shape
    if C != 3:
        raise ValueError("expected an (H, W, 3) RGB image")

    colors_np = np.asarray(colors, dtype=np.int64).reshape(-1, 3)
    ids_np = np.asarray(class_ids, dtype=np.int64).reshape(-1)
    if colors_np.shape[0] != ids_np.shape[0] or ids_np.shape[0] == 0:
        raise ValueError("colors and class_ids must be non-empty and match")
    if colors_np.min() < 0 or colors_np.max() > 255:
        raise ValueError("color-map entries must be 8-bit values in [0, 255]")

    odt = _select_out_dtype(ids_np, int(fill), out_dtype)
    # Packed table is non-negative by construction, so the -1 sentinel used for
    # out-of-range pixels can never match.
    packed_colors_np = (colors_np[:, 0] | (colors_np[:, 1] << 8)
                        | (colors_np[:, 2] << 16)).astype(np.int32)

    align = max(8, 32 // odt.itemsize)    # sublane packing of the output dtype
    if tile_h is None:
        tile_h = _choose_tile_h(H, W, odt.itemsize, align, vmem_budget_bytes)
    else:
        tile_h = _validate_tile_h(int(tile_h), H, W, odt.itemsize, align,
                                  vmem_budget_bytes)

    out = _to_mask_core(
        x_hwc,
        jnp.asarray(packed_colors_np),
        jnp.asarray(ids_np.astype(np.int32)),
        fill=int(fill), tile_h=int(tile_h), out_dtype=odt.name)
    if as_int64:
        out = out.astype(jnp.int64)
    return out


def make_to_mask(map_, *, fill=0, **kwargs):
    """Mirror of ToMask(map_, fill=...): returns x_hwc -> (1, H, W) mask."""
    colors = np.array([list(k) for k in map_.keys()], dtype=np.int64)
    class_ids = np.array(list(map_.values()), dtype=np.int64)
    return functools.partial(to_mask, colors=colors, class_ids=class_ids,
                             fill=fill, **kwargs)


# ---------------------------------------------------------------------------
# Pure-JAX reference (mirrors image2Map)
# ---------------------------------------------------------------------------
def _reference(x_hwc, colors, class_ids, fill=0):
    colors = jnp.asarray(np.asarray(colors, dtype=np.int32))
    class_ids = jnp.asarray(np.asarray(class_ids, dtype=np.int32))
    mask = jnp.full(x_hwc.shape[:2], fill, dtype=jnp.int32)
    for k in range(colors.shape[0]):
        match = jnp.all(x_hwc.astype(jnp.int32) == colors[k], axis=-1)
        mask = jnp.where(match, class_ids[k], mask)
    return mask[None]


if __name__ == "__main__":
    key = jax.random.PRNGKey(0)
    k1, k2 = jax.random.split(key)

    map_ = {
        (255, 0, 0): 1,
        (0, 255, 0): 2,
        (0, 0, 255): 3,
        (255, 255, 0): 4,
    }
    colors = np.array([list(c) for c in map_.keys()], dtype=np.int64)
    class_ids = np.array(list(map_.values()), dtype=np.int64)
    palette = np.concatenate([colors, np.array([[7, 7, 7]])], axis=0)  # +unknown

    # Test 1: small unaligned H/W (single full-shape block), auto int8 output.
    H, W = 20, 24
    pick = jax.random.randint(k1, (H, W), 0, palette.shape[0], dtype=jnp.int32)
    x = jnp.asarray(palette, dtype=jnp.int32)[pick].astype(jnp.uint8)
    fn = make_to_mask(map_)
    mask = jax.block_until_ready(fn(x))
    ref = _reference(x, colors, class_ids)
    assert mask.shape == (1, H, W)
    assert mask.dtype == jnp.int8
    assert bool(jnp.array_equal(mask.astype(jnp.int32), ref))

    # Test 2: multi-tile ragged grid (H not a multiple of tile_h), int8 output.
    H2, W2 = 100, 24
    pick2 = jax.random.randint(k2, (H2, W2), 0, palette.shape[0], dtype=jnp.int32)
    x2 = jnp.asarray(palette, dtype=jnp.int32)[pick2].astype(jnp.uint8)
    mask2 = jax.block_until_ready(to_mask(x2, colors, class_ids, fill=0, tile_h=32))
    ref2 = _reference(x2, colors, class_ids)
    assert mask2.shape == (1, H2, W2)
    assert bool(jnp.array_equal(mask2.astype(jnp.int32), ref2))

    # Test 3: explicit int32 output (torch-like wider ids path).
    mask3 = jax.block_until_ready(
        to_mask(x, colors, class_ids, fill=0, out_dtype=jnp.int32))
    assert mask3.dtype == jnp.int32
    assert bool(jnp.array_equal(mask3, ref))

    print("KERNEL_OK")
</pallas_src>

<mosaic_0001>
module attributes {stable_mosaic.version = 11 : i64} {
  func.func @_tomask_kernel(%arg0: i32, %arg1: memref<4xi32, #tpu.memory_space<smem>>, %arg2: memref<4xi32, #tpu.memory_space<smem>>, %arg3: memref<20x24xi32, #tpu.memory_space<vmem>>, %arg4: memref<1x20x24xi8, #tpu.memory_space<vmem>>) attributes {dimension_semantics = [#tpu.dimension_semantics<parallel>], iteration_bounds = array<i64: 1>, scalar_prefetch = 2 : i64, scratch_operands = 0 : i64, tpu.core_type = #tpu.core_type<tc>, window_params = [{transform_indices = @transform_0, window_bounds = array<i64: 20, 24>}, {transform_indices = @transform_1, window_bounds = array<i64: 1, 20, 24>}]} {
    %c0 = arith.constant 0 : index
    %c0_0 = arith.constant 0 : index
    %0 = vector.load %arg3[%c0, %c0_0] : memref<20x24xi32, #tpu.memory_space<vmem>>, vector<20x24xi32>
    %c0_i32 = arith.constant 0 : i32
    %1 = vector.broadcast %c0_i32 : i32 to vector<20x24xi32>
    %c0_1 = arith.constant 0 : index
    %2 = memref.load %arg1[%c0_1] : memref<4xi32, #tpu.memory_space<smem>>
    %3 = vector.broadcast %2 : i32 to vector<20x24xi32>
    %4 = arith.cmpi eq, %0, %3 : vector<20x24xi32>
    %c0_2 = arith.constant 0 : index
    %5 = memref.load %arg2[%c0_2] : memref<4xi32, #tpu.memory_space<smem>>
    %6 = vector.broadcast %5 : i32 to vector<20x24xi32>
    %7 = arith.select %4, %6, %1 : vector<20x24xi1>, vector<20x24xi32>
    %c1 = arith.constant 1 : index
    %8 = memref.load %arg1[%c1] : memref<4xi32, #tpu.memory_space<smem>>
    %9 = vector.broadcast %8 : i32 to vector<20x24xi32>
    %10 = arith.cmpi eq, %0, %9 : vector<20x24xi32>
    %c1_3 = arith.constant 1 : index
    %11 = memref.load %arg2[%c1_3] : memref<4xi32, #tpu.memory_space<smem>>
    %12 = vector.broadcast %11 : i32 to vector<20x24xi32>
    %13 = arith.select %10, %12, %7 : vector<20x24xi1>, vector<20x24xi32>
    %c2 = arith.constant 2 : index
    %14 = memref.load %arg1[%c2] : memref<4xi32, #tpu.memory_space<smem>>
    %15 = vector.broadcast %14 : i32 to vector<20x24xi32>
    %16 = arith.cmpi eq, %0, %15 : vector<20x24xi32>
    %c2_4 = arith.constant 2 : index
    %17 = memref.load %arg2[%c2_4] : memref<4xi32, #tpu.memory_space<smem>>
    %18 = vector.broadcast %17 : i32 to vector<20x24xi32>
    %19 = arith.select %16, %18, %13 : vector<20x24xi1>, vector<20x24xi32>
    %c3 = arith.constant 3 : index
    %20 = memref.load %arg1[%c3] : memref<4xi32, #tpu.memory_space<smem>>
    %21 = vector.broadcast %20 : i32 to vector<20x24xi32>
    %22 = arith.cmpi eq, %0, %21 : vector<20x24xi32>
    %c3_5 = arith.constant 3 : index
    %23 = memref.load %arg2[%c3_5] : memref<4xi32, #tpu.memory_space<smem>>
    %24 = vector.broadcast %23 : i32 to vector<20x24xi32>
    %25 = arith.select %22, %24, %19 : vector<20x24xi1>, vector<20x24xi32>
    %26 = arith.trunci %25 : vector<20x24xi32> to vector<20x24xi8>
    %c0_6 = arith.constant 0 : index
    %c0_7 = arith.constant 0 : index
    %c0_8 = arith.constant 0 : index
    %27 = vector.load %arg4[%c0_6, %c0_7, %c0_8] : memref<1x20x24xi8, #tpu.memory_space<vmem>>, vector<1x20x24xi8>
    %28 = vector.shape_cast %27 : vector<1x20x24xi8> to vector<20x24xi8>
    %29 = vector.shape_cast %26 : vector<20x24xi8> to vector<1x20x24xi8>
    tpu.vector_store %arg4[%c0_6, %c0_7, %c0_8], %29 {strides = array<i32>} : memref<1x20x24xi8, #tpu.memory_space<vmem>>, vector<1x20x24xi8>,
    return
  }
  func.func @transform_0(%arg0: i32, %arg1: memref<4xi32, #tpu.memory_space<smem>>, %arg2: memref<4xi32, #tpu.memory_space<smem>>) -> (i32, i32) {
    %c0_i32 = arith.constant 0 : i32
    %c0_i32_0 = arith.constant 0 : i32
    return %arg0, %c0_i32 : i32, i32
  }
  func.func @transform_1(%arg0: i32, %arg1: memref<4xi32, #tpu.memory_space<smem>>, %arg2: memref<4xi32, #tpu.memory_space<smem>>) -> (i32, i32, i32) {
    %c0_i32 = arith.constant 0 : i32
    %c0_i32_0 = arith.constant 0 : i32
    %c0_i32_1 = arith.constant 0 : i32
    return %c0_i32, %arg0, %c0_i32_0 : i32, i32, i32
  }
}

</mosaic_0001>

<llo_original>
// kernel: _to_mask_core.1
$region0: #{_to_mask_core.1}
  #allocation0 [shape = 'u32[]', space=smem, size = 0x4, offset = 0x4, fixed_abs, tag = 'smem constant byte address 0x4 - core index']
  #allocation1 [shape = 'u32[72,128]{1,0:T(1,128)}', space=vmem, size = 0x9000, scoped, tag = 'internal scratch']
  #allocation2 [shape = 's32[1]{0}', space=sflag, size = 0x4, scoped, tag = 'scoped memory for _to_mask_core.1']
  #allocation3 [shape = 'u8[512]{0}', space=smem, size = 0x200, scoped, tag = 'prefetched SMEM operand 0']
  #allocation4 [shape = 'u8[512]{0}', space=smem, size = 0x200, scoped, tag = 'prefetched SMEM operand 1']
  %s0 = inlined_call_operand.vmem [shape: s32[4], index: 0, kind: input, shape index: {}]
  %s1 = inlined_call_operand.vmem [shape: s32[4], index: 1, kind: input, shape index: {}]
  %s2 = inlined_call_operand.vmem [shape: s32[20,24], index: 2, kind: input, shape index: {}]
  %s3 = inlined_call_operand.hbm [shape: s8[1,20,24], index: 3, kind: output, shape index: {}]
  %s4 = sld [smem:[#allocation0]]
  $region14: #{_to_mask_core.1} parent=0
    _
  %s6 = ssub.s32 1, %s4
  %s7 = scalar_select 0, %s6, %s4
  %s9 = sshll.u32 %s0, 4
  %s10 = int_to_ptr.vmem [resolvable:$true] %s9
  %12 = dma.vmem_to_smem %s10, 16, [#allocation3], [#allocation2]
  %s14 = sshll.u32 %s1, 4
  %s15 = int_to_ptr.vmem [resolvable:$true] %s14
  %17 = dma.vmem_to_smem %s15, 16, [#allocation4], [#allocation2]
  %19 = dma.done [#allocation2], 32
  %20 = sfence
  $region1: #{_to_mask_core.1} parent=0
    #allocation5 [shape = 'u8[3072]{0}', space=vmem, size = 0xc00, scoped, tag = 'output window, operand 0, single buffered']
    #allocation6 [shape = 's32[1]{0}', space=sflag, size = 0x4, scoped, tag = 'scoped memory for _to_mask_core.1']
    %21 = vsyncpa [#allocation6], 0
    // Predicated region
    $region2: #{_to_mask_core.1} parent=1 // pred_check
      _
    $region3: #{_to_mask_core.1} parent=1 // pred_check_branch
      %23 = sbr.rel (0) target = $region5
    $region4: #{_to_mask_core.1} parent=1 // pred_region
      _
    $region5: #{_to_mask_core.1} parent=1 // pred_fallthru
      _
    %v24 = vld [vmem:[%s2] sm:$0xff]
    %v25 = vld [vmem:[%s2 + $0x8] sm:$0xff]
    %v26 = vld [vmem:[%s2 + $0x10] sm:$0xf]
    %s27 = sld [smem:[#allocation3]]
    %v28 = vstv %s27
    %vm29 = vcmp.eq.s32.totalorder %v24, %v28
    %vm30 = vcmp.eq.s32.totalorder %v25, %v28
    %vm31 = vcmp.eq.s32.totalorder %v26, %v28
    %s32 = sld [smem:[#allocation4]]
    %v33 = vstv %s32
    %v34 = vsel %vm29, %v33, 0
    %v35 = vsel %vm30, %v33, 0
    %v36 = vsel %vm31, %v33, 0
    %s37 = sld [smem:[#allocation3 + $0x1]]
    %v38 = vstv %s37
    %vm39 = vcmp.eq.s32.totalorder %v24, %v38
    %vm40 = vcmp.eq.s32.totalorder %v25, %v38
    %vm41 = vcmp.eq.s32.totalorder %v26, %v38
    %s42 = sld [smem:[#allocation4 + $0x1]]
    %v43 = vstv %s42
    %v44 = vsel %vm39, %v43, %v34
    %v45 = vsel %vm40, %v43, %v35
    %v46 = vsel %vm41, %v43, %v36
    %s47 = sld [smem:[#allocation3 + $0x2]]
    %v48 = vstv %s47
    %vm49 = vcmp.eq.s32.totalorder %v24, %v48
    %vm50 = vcmp.eq.s32.totalorder %v25, %v48
    %vm51 = vcmp.eq.s32.totalorder %v26, %v48
    %s52 = sld [smem:[#allocation4 + $0x2]]
    %v53 = vstv %s52
    %v54 = vsel %vm49, %v53, %v44
    %v55 = vsel %vm50, %v53, %v45
    %v56 = vsel %vm51, %v53, %v46
    %s57 = sld [smem:[#allocation3 + $0x3]]
    %v58 = vstv %s57
    %vm59 = vcmp.eq.s32.totalorder %v24, %v58
    %vm60 = vcmp.eq.s32.totalorder %v25, %v58
    %vm61 = vcmp.eq.s32.totalorder %v26, %v58
    %s62 = sld [smem:[#allocation4 + $0x3]]
    %v63 = vstv %s62
    %v64 = vsel %vm59, %v63, %v54
    %v65 = vsel %vm60, %v63, %v55
    %v66 = vsel %vm61, %v63, %v56
    %v67 = vpack.c.b16 %v64, %v64
    %v68 = vpack.c.b8 %v67, %v67
    %v69 = vpack.c.b16 %v65, %v65
    %v70 = vpack.c.b8 %v69, %v69
    %v71 = vpack.c.b16 %v66, %v66
    %v72 = vpack.c.b8 %v71, %v71
    %vm73 = vcmask 189440
    %74 = vst.msk [vmem:[#allocation5] sm:$0x3] %vm73, %v68
    %75 = vst.msk [vmem:[#allocation5 + $0x2] sm:$0x3] %vm73, %v70
    %vm76 = vcmask 188416
    %77 = vst.msk [vmem:[#allocation5 + $0x4] sm:$0x1] %vm76, %v72
    // Predicated region
    $region6: #{_to_mask_core.1} parent=1 // pred_check
      _
    $region7: #{_to_mask_core.1} parent=1 // pred_check_branch
      %79 = sbr.rel (0) target = $region9
    $region8: #{_to_mask_core.1} parent=1 // pred_region
      %81 = vsyncadd [#allocation6], 0
      %s82 = sshll.u32 [#allocation5], 4
      %s83 = int_to_ptr.vmem [resolvable:$true] %s82
      %s84 = sshll.u32 %s3, 4
      %s85 = int_to_ptr.hbm [resolvable:$true] %s84
      %90 = dma.vmem_to_hbm [thread:$0]  %s83, 96, %s85, [#allocation6], 32, 32, 2
    $region9: #{_to_mask_core.1} parent=1 // pred_fallthru
      _
    // Predicated region
    $region10: #{_to_mask_core.1} parent=1 // pred_check
      _
    $region11: #{_to_mask_core.1} parent=1 // pred_check_branch
      %92 = sbr.rel (0) target = $region13
    $region12: #{_to_mask_core.1} parent=1 // pred_region
      %94 = dma.done [#allocation6], 96
    $region13: #{_to_mask_core.1} parent=1 // pred_fallthru
      _
    %95 = vsyncpa [#allocation6], 1

</llo_original>
